<compile_context>
chip_gen: v7x
topology: tpu7x:2x2x1
jax: 0.10.0
libtpu: 0.0.40
codegen_flags: <defaults>
</compile_context>

<pallas_src>
import functools
import math

import jax
import jax.numpy as jnp
from jax import lax
from jax.experimental import pallas as pl
from jax.experimental.pallas import tpu as pltpu


def _reward_criterion_kernel(inp_ref, seq_ref, rew_ref, num_ref, den_ref, *,
                             seq_len, rows_total, block_rows, mask_rows):
    """One row tile of the flattened [R, C] view: emit partial (num, den)."""
    i = pl.program_id(0)

    inp = inp_ref[...].astype(jnp.float32)
    rew = rew_ref[...].astype(jnp.float32)
    sq = seq_ref[...]
    if sq.dtype != jnp.int32:
        # Sub-32-bit integer rolls can hit relayout restrictions; widen first.
        sq = sq.astype(jnp.int32)

    rows, cols = sq.shape

    # prev[r, c] = sq[r, c-1]  (XLU roll; the wrap at c==0 lands on a
    # sequence-start column whose mask is forced to 1 below, so it is harmless).
    prev = pltpu.roll(sq, shift=1, axis=1)

    # Sequence-start columns: flat index % T == 0.  Computed on a (1, C) iota
    # only (a few vregs), then broadcast inside the int32 maximum.
    lane = lax.broadcasted_iota(jnp.int32, (1, cols), 1)
    start = ((lane % seq_len) == 0).astype(jnp.int32)          # (1, C) in {0, 1}

    # mask == 1  <=>  start | (prev > 0)  <=>  max(prev, start) > 0
    alive = jnp.maximum(prev, start)                            # (rows, C) int32
    weighted = inp * rew

    def emit(alive_vals):
        keep = alive_vals > 0
        # where() (not multiply) so garbage in the padded tail of a partial
        # block can never poison the sums with NaN/Inf.
        num = jnp.sum(jnp.where(keep, weighted, 0.0))
        den = jnp.sum(jnp.where(keep, 1.0, 0.0))
        num_ref[...] = jnp.full(num_ref.shape, num, jnp.float32)
        den_ref[...] = jnp.full(den_ref.shape, den, jnp.float32)

    if not mask_rows:
        # Row count divides evenly: every block is fully valid, no bounds work.
        emit(alive)
    else:
        last = pl.num_programs(0) - 1

        @pl.when(i != last)
        def _full_block():
            emit(alive)

        @pl.when(i == last)
        def _partial_block():
            r_idx = lax.broadcasted_iota(jnp.int32, (rows, 1), 0) + i * block_rows
            row_ok = (r_idx < rows_total).astype(jnp.int32)     # (rows, 1) in {0, 1}
            emit(alive * row_ok)                                # int broadcast, no i1 bcast


def _row_packing(batch, seq_len):
    """Rows of the original [B, T] to merge per line of the [B//k, k*T] view."""
    if batch <= 1:
        return 1
    # Smallest k making the line width k*T a multiple of 128 (full lane use).
    k_full = 128 // math.gcd(seq_len, 128)
    if 1 < k_full <= batch and batch % k_full == 0:
        return k_full
    # Otherwise at least reach ~128 lanes when T is narrow.
    if seq_len < 128:
        k_min = -(-128 // seq_len)
        if 1 < k_min <= batch and batch % k_min == 0:
            return k_min
    return 1


def _sublane_align(*dtypes):
    a = 8
    for dt in dtypes:
        itemsize = jnp.dtype(dt).itemsize
        a = max(a, 8 * max(1, 4 // itemsize))   # f32/i32->8, bf16->16, i8->32
    return a


def reward_criterion(logprobs, seq, reward, *, block_rows=None):
    """Pallas TPU implementation of RewardCriterion.forward.

    logprobs, seq, reward: [B, T] arrays (logprobs/reward float, seq integer).
    """
    B, T = logprobs.shape

    # Free (row-major, layout-preserving) reshape to a lane-dense [R, C] view.
    k = _row_packing(B, T)
    R, C = B // k, k * T
    inp = logprobs.reshape(R, C)
    sq = seq.reshape(R, C)
    rw = reward.reshape(R, C)

    # Generation-aware VMEM budget: half the physical capacity, clamped to
    # [32, 64] MiB (64 MiB on 128-MiB v5e/v6e, 32 MiB on 64-MiB v7x).
    try:
        vmem_cap = int(pltpu.get_tpu_info().vmem_capacity_bytes)
    except Exception:  # pragma: no cover - conservative fallback
        vmem_cap = 64 << 20
    vmem_limit = max(32 << 20, min(64 << 20, vmem_cap // 2))

    align = _sublane_align(inp.dtype, sq.dtype, rw.dtype)

    # Row-block budget: ~80% of the VMEM limit split over 3 input streams x 2
    # pipeline buffers (outputs are a few bytes).  Multi-MiB tiles -> few grid
    # steps, DMA near the roofline plateau.
    per_row_bytes = C * (inp.dtype.itemsize + sq.dtype.itemsize + rw.dtype.itemsize)
    usable = int(vmem_limit * 0.8)
    rows_budget = max(align, usable // (2 * per_row_bytes))
    # TODO(synk): for pathologically long single rows (per_row_bytes*2 > usable)
    # the time axis would also need tiling; not needed for realistic SCST shapes.

    if block_rows is None:
        block_rows = rows_budget
    block_rows = int(block_rows)
    if block_rows >= R:
        block_rows = R                      # single full block (always legal)
    else:
        block_rows = max(align, (block_rows // align) * align)
        if block_rows >= R:
            block_rows = R

    grid = (pl.cdiv(R, block_rows),)
    num_blocks = grid[0]
    mask_rows = (R % block_rows) != 0

    kernel = functools.partial(
        _reward_criterion_kernel,
        seq_len=T,
        rows_total=R,
        block_rows=block_rows,
        mask_rows=mask_rows,
    )

    blk = (block_rows, C)
    imap = lambda i: (i, 0)

    bytes_accessed = (logprobs.size * logprobs.dtype.itemsize
                      + seq.size * seq.dtype.itemsize
                      + reward.size * reward.dtype.itemsize)

    num_p, den_p = pl.pallas_call(
        kernel,
        grid=grid,
        in_specs=[
            pl.BlockSpec(blk, imap),   # logprobs
            pl.BlockSpec(blk, imap),   # seq
            pl.BlockSpec(blk, imap),   # reward
        ],
        out_specs=[
            pl.BlockSpec((1, 1, 1), lambda i: (i, 0, 0)),
            pl.BlockSpec((1, 1, 1), lambda i: (i, 0, 0)),
        ],
        out_shape=[
            jax.ShapeDtypeStruct((num_blocks, 1, 1), jnp.float32),
            jax.ShapeDtypeStruct((num_blocks, 1, 1), jnp.float32),
        ],
        compiler_params=pltpu.CompilerParams(
            dimension_semantics=("parallel",),        # independent row tiles
            vmem_limit_bytes=vmem_limit,
        ),
        cost_estimate=pl.CostEstimate(
            flops=6 * B * T, transcendentals=0, bytes_accessed=bytes_accessed),
    )(inp, sq, rw)

    num = jnp.sum(num_p[:, 0, 0])
    den = jnp.sum(den_p[:, 0, 0])
    return -num / den


def _reference(logprobs, seq, reward):
    # Pure-JAX reference mirroring the PyTorch code.
    lp = logprobs.astype(jnp.float32)
    rw = reward.astype(jnp.float32)
    mask = (seq > 0).astype(jnp.float32)
    mask = jnp.concatenate(
        [jnp.ones((mask.shape[0], 1), jnp.float32), mask[:, :-1]], axis=1)
    out = -lp * rw * mask
    return jnp.sum(out) / jnp.sum(mask)


if __name__ == "__main__":
    key = jax.random.PRNGKey(0)

    # --- Case 1: tiny f32 case, no row packing possible (B < k), single block ---
    k1, k2, k3, key = jax.random.split(key, 4)
    B, T = 2, 8
    logprobs = -jax.random.uniform(k1, (B, T), jnp.float32, minval=0.1, maxval=5.0)
    seq = jax.random.randint(k2, (B, T), minval=0, maxval=5, dtype=jnp.int32)
    reward = jax.random.normal(k3, (B, T), jnp.float32)

    loss1 = reward_criterion(logprobs, seq, reward)
    jax.block_until_ready(loss1)
    ref1 = _reference(logprobs, seq, reward)
    assert jnp.allclose(loss1, ref1, rtol=1e-5, atol=1e-5), (loss1, ref1)

    # --- Case 2: bf16 inputs, lane-dense row packing (k=8 -> 128-wide rows),
    #             forced small row block so the grid has a partial last block ---
    k1, k2, k3, key = jax.random.split(key, 4)
    B, T = 200, 16
    logprobs2 = (-jax.random.uniform(k1, (B, T), jnp.float32,
                                     minval=0.1, maxval=5.0)).astype(jnp.bfloat16)
    seq2 = jax.random.randint(k2, (B, T), minval=0, maxval=5, dtype=jnp.int32)
    reward2 = jax.random.normal(k3, (B, T), jnp.float32).astype(jnp.bfloat16)

    loss2 = reward_criterion(logprobs2, seq2, reward2, block_rows=16)
    jax.block_until_ready(loss2)
    ref2 = _reference(logprobs2, seq2, reward2)
    assert jnp.allclose(loss2, ref2, rtol=1e-3, atol=1e-3), (loss2, ref2)

    print("KERNEL_OK")
</pallas_src>

<mosaic_0001>
module attributes {stable_mosaic.version = 11 : i64} {
  func.func @_reward_criterion_kernel(%arg0: i32, %arg1: memref<2x8xf32, #tpu.memory_space<vmem>>, %arg2: memref<2x8xi32, #tpu.memory_space<vmem>>, %arg3: memref<2x8xf32, #tpu.memory_space<vmem>>, %arg4: memref<1x1x1xf32, #tpu.memory_space<vmem>>, %arg5: memref<1x1x1xf32, #tpu.memory_space<vmem>>) attributes {dimension_semantics = [#tpu.dimension_semantics<parallel>], iteration_bounds = array<i64: 1>, scalar_prefetch = 0 : i64, scratch_operands = 0 : i64, tpu.core_type = #tpu.core_type<tc>, window_params = [{transform_indices = @transform_0, window_bounds = array<i64: 2, 8>}, {transform_indices = @transform_1, window_bounds = array<i64: 2, 8>}, {transform_indices = @transform_2, window_bounds = array<i64: 2, 8>}, {transform_indices = @transform_3, window_bounds = array<i64: 1, 1, 1>}, {transform_indices = @transform_4, window_bounds = array<i64: 1, 1, 1>}]} {
    %c0 = arith.constant 0 : index
    %c0_0 = arith.constant 0 : index
    %0 = vector.load %arg1[%c0, %c0_0] : memref<2x8xf32, #tpu.memory_space<vmem>>, vector<2x8xf32>
    %c0_1 = arith.constant 0 : index
    %c0_2 = arith.constant 0 : index
    %1 = vector.load %arg3[%c0_1, %c0_2] : memref<2x8xf32, #tpu.memory_space<vmem>>, vector<2x8xf32>
    %c0_3 = arith.constant 0 : index
    %c0_4 = arith.constant 0 : index
    %2 = vector.load %arg2[%c0_3, %c0_4] : memref<2x8xi32, #tpu.memory_space<vmem>>, vector<2x8xi32>
    %c1_i32 = arith.constant 1 : i32
    %3 = tpu.dynamic_rotate %2 by %c1_i32 dim 1 : vector<2x8xi32>, i32 -> vector<2x8xi32>
    %4 = tpu.iota {dimensions = array<i32: 1>} : vector<1x8xi32>
    %c8_i32 = arith.constant 8 : i32
    %c0_i32 = arith.constant 0 : i32
    %5 = arith.cmpi eq, %c8_i32, %c0_i32 : i32
    %c1_i32_5 = arith.constant 1 : i32
    %6 = arith.select %5, %c1_i32_5, %c8_i32 : i32
    %7 = vector.broadcast %6 : i32 to vector<1x8xi32>
    %8 = arith.remsi %4, %7 : vector<1x8xi32>
    %c0_i32_6 = arith.constant 0 : i32
    %9 = vector.broadcast %c0_i32_6 : i32 to vector<1x8xi32>
    %10 = arith.cmpi ne, %8, %9 : vector<1x8xi32>
    %c0_i32_7 = arith.constant 0 : i32
    %11 = vector.broadcast %c0_i32_7 : i32 to vector<1x8xi32>
    %12 = arith.cmpi slt, %8, %11 : vector<1x8xi32>
    %c0_i32_8 = arith.constant 0 : i32
    %13 = arith.cmpi slt, %6, %c0_i32_8 : i32
    %14 = vector.broadcast %13 : i1 to vector<1x8xi1>
    %15 = vector.broadcast %14 : vector<1x8xi1> to vector<1x8xi1>
    %16 = arith.xori %12, %15 : vector<1x8xi1>
    %17 = arith.andi %16, %10 : vector<1x8xi1>
    %18 = vector.broadcast %6 : i32 to vector<1x8xi32>
    %19 = arith.addi %8, %18 : vector<1x8xi32>
    %20 = arith.select %17, %19, %8 : vector<1x8xi1>, vector<1x8xi32>
    %c0_i32_9 = arith.constant 0 : i32
    %21 = vector.broadcast %c0_i32_9 : i32 to vector<1x8xi32>
    %22 = arith.cmpi eq, %20, %21 : vector<1x8xi32>
    %23 = arith.extui %22 : vector<1x8xi1> to vector<1x8xi32>
    %24 = vector.broadcast %23 : vector<1x8xi32> to vector<2x8xi32>
    %25 = arith.maxsi %3, %24 : vector<2x8xi32>
    %26 = arith.mulf %0, %1 : vector<2x8xf32>
    %c0_i32_10 = arith.constant 0 : i32
    %27 = vector.broadcast %c0_i32_10 : i32 to vector<2x8xi32>
    %28 = arith.cmpi sgt, %25, %27 : vector<2x8xi32>
    %cst = arith.constant 0.000000e+00 : f32
    %29 = vector.broadcast %cst : f32 to vector<2x8xf32>
    %30 = arith.select %28, %26, %29 : vector<2x8xi1>, vector<2x8xf32>
    %31 = vector.shape_cast %30 : vector<2x8xf32> to vector<1x2x8xf32>
    %cst_11 = arith.constant dense<0.000000e+00> : vector<1xf32>
    %32 = vector.multi_reduction <add>, %31, %cst_11 [1, 2] : vector<1x2x8xf32> to vector<1xf32>
    %33 = vector.shape_cast %32 : vector<1xf32> to vector<1x1x1xf32>
    %34 = vector.extract %33[0, 0, 0] : f32 from vector<1x1x1xf32>
    %cst_12 = arith.constant 1.000000e+00 : f32
    %cst_13 = arith.constant 0.000000e+00 : f32
    %35 = vector.broadcast %cst_12 : f32 to vector<2x8xf32>
    %36 = vector.broadcast %cst_13 : f32 to vector<2x8xf32>
    %37 = arith.select %28, %35, %36 : vector<2x8xi1>, vector<2x8xf32>
    %38 = vector.shape_cast %37 : vector<2x8xf32> to vector<1x2x8xf32>
    %cst_14 = arith.constant dense<0.000000e+00> : vector<1xf32>
    %39 = vector.multi_reduction <add>, %38, %cst_14 [1, 2] : vector<1x2x8xf32> to vector<1xf32>
    %40 = vector.shape_cast %39 : vector<1xf32> to vector<1x1x1xf32>
    %41 = vector.extract %40[0, 0, 0] : f32 from vector<1x1x1xf32>
    %42 = vector.broadcast %34 : f32 to vector<1x1x1xf32>
    %c0_15 = arith.constant 0 : index
    %c0_16 = arith.constant 0 : index
    %c0_17 = arith.constant 0 : index
    %43 = vector.load %arg4[%c0_15, %c0_16, %c0_17] : memref<1x1x1xf32, #tpu.memory_space<vmem>>, vector<1x1x1xf32>
    tpu.vector_store %arg4[%c0_15, %c0_16, %c0_17], %42 {strides = array<i32>} : memref<1x1x1xf32, #tpu.memory_space<vmem>>, vector<1x1x1xf32>,
    %44 = vector.broadcast %41 : f32 to vector<1x1x1xf32>
    %c0_18 = arith.constant 0 : index
    %c0_19 = arith.constant 0 : index
    %c0_20 = arith.constant 0 : index
    %45 = vector.load %arg5[%c0_18, %c0_19, %c0_20] : memref<1x1x1xf32, #tpu.memory_space<vmem>>, vector<1x1x1xf32>
    tpu.vector_store %arg5[%c0_18, %c0_19, %c0_20], %44 {strides = array<i32>} : memref<1x1x1xf32, #tpu.memory_space<vmem>>, vector<1x1x1xf32>,
    return
  }
  func.func @transform_0(%arg0: i32) -> (i32, i32) {
    %c0_i32 = arith.constant 0 : i32
    %c0_i32_0 = arith.constant 0 : i32
    return %arg0, %c0_i32 : i32, i32
  }
  func.func @transform_1(%arg0: i32) -> (i32, i32) {
    %c0_i32 = arith.constant 0 : i32
    %c0_i32_0 = arith.constant 0 : i32
    return %arg0, %c0_i32 : i32, i32
  }
  func.func @transform_2(%arg0: i32) -> (i32, i32) {
    %c0_i32 = arith.constant 0 : i32
    %c0_i32_0 = arith.constant 0 : i32
    return %arg0, %c0_i32 : i32, i32
  }
  func.func @transform_3(%arg0: i32) -> (i32, i32, i32) {
    %c0_i32 = arith.constant 0 : i32
    %c0_i32_0 = arith.constant 0 : i32
    %c0_i32_1 = arith.constant 0 : i32
    return %arg0, %c0_i32, %c0_i32_0 : i32, i32, i32
  }
  func.func @transform_4(%arg0: i32) -> (i32, i32, i32) {
    %c0_i32 = arith.constant 0 : i32
    %c0_i32_0 = arith.constant 0 : i32
    %c0_i32_1 = arith.constant 0 : i32
    return %arg0, %c0_i32, %c0_i32_0 : i32, i32, i32
  }
}

</mosaic_0001>

<llo_original>
// kernel: tpu_custom_call.1
$region0: #{tpu_custom_call.1}
  #allocation0 [shape = 'u32[]', space=smem, size = 0x4, offset = 0x4, fixed_abs, tag = 'smem constant byte address 0x4 - core index']
  #allocation1 [shape = 'u32[144,128]{1,0:T(1,128)}', space=vmem, size = 0x12000, scoped, tag = 'internal scratch']
  %s0 = inlined_call_operand.hbm [shape: f32[2,8], index: 0, kind: input, shape index: {}]
  %s1 = inlined_call_operand.vmem [shape: s32[2,8], index: 1, kind: input, shape index: {}]
  %s2 = inlined_call_operand.vmem [shape: f32[2,8], index: 2, kind: input, shape index: {}]
  %s3 = inlined_call_operand.hbm [shape: f32[1,1,1], index: 3, kind: output, shape index: {0}]
  %s4 = inlined_call_operand.hbm [shape: f32[1,1,1], index: 4, kind: output, shape index: {1}]
  %5 = xla_tuple %s3, %s4
  %s6 = sld [smem:[#allocation0]]
  $region34: #{tpu_custom_call.1} parent=0
    _
  %s8 = ssub.s32 1, %s6
  %s9 = scalar_select 0, %s8, %s6
  $region1: #{tpu_custom_call.1} parent=0
    #allocation2 [shape = 'u8[1024]{0}', space=vmem, size = 0x400, scoped, tag = 'input window, operand 0, single buffered']
    #allocation3 [shape = 's32[1]{0}', space=sflag, size = 0x4, scoped, tag = 'scoped memory for tpu_custom_call.1']
    #allocation4 [shape = 's32[1]{0}', space=sflag, size = 0x4, scoped, tag = 'scoped memory for tpu_custom_call.1']
    #allocation5 [shape = 'u8[512]{0}', space=vmem, size = 0x400, scoped, tag = 'output window, operand 0, single buffered']
    #allocation6 [shape = 'u8[512]{0}', space=vmem, size = 0x400, scoped, tag = 'output window, operand 1, single buffered']
    #allocation7 [shape = 's32[1]{0}', space=sflag, size = 0x4, scoped, tag = 'scoped memory for tpu_custom_call.1']
    %10 = vsyncpa [#allocation3], 0
    %11 = vsyncpa [#allocation4], 0
    %12 = vsyncpa [#allocation7], 0
    // Predicated region
    $region2: #{tpu_custom_call.1} parent=1 // pred_check
      _
    $region3: #{tpu_custom_call.1} parent=1 // pred_check_branch
      %14 = sbr.rel (0) target = $region5
    $region4: #{tpu_custom_call.1} parent=1 // pred_region
      %s16 = ssub.s32 32, 32
      %17 = vsyncadd [#allocation3], %s16
      %s19 = sshll.u32 [#allocation2], 4
      %s20 = int_to_ptr.vmem [resolvable:$true] %s19
      %22 = dma.hbm_to_vmem [thread:$0]  %s0, 32, %s20, [#allocation3]
    $region5: #{tpu_custom_call.1} parent=1 // pred_fallthru
      _
    // Predicated region
    $region6: #{tpu_custom_call.1} parent=1 // pred_check
      _
    $region7: #{tpu_custom_call.1} parent=1 // pred_check_branch
      %24 = sbr.rel (0) target = $region9
    $region8: #{tpu_custom_call.1} parent=1 // pred_region
      _
    $region9: #{tpu_custom_call.1} parent=1 // pred_fallthru
      _
    // Predicated region
    $region10: #{tpu_custom_call.1} parent=1 // pred_check
      _
    $region11: #{tpu_custom_call.1} parent=1 // pred_check_branch
      %26 = sbr.rel (0) target = $region13
    $region12: #{tpu_custom_call.1} parent=1 // pred_region
      _
    $region13: #{tpu_custom_call.1} parent=1 // pred_fallthru
      _
    // Predicated region
    $region14: #{tpu_custom_call.1} parent=1 // pred_check
      _
    $region15: #{tpu_custom_call.1} parent=1 // pred_check_branch
      %28 = sbr.rel (0) target = $region17
    $region16: #{tpu_custom_call.1} parent=1 // pred_region
      %29 = dma.done [#allocation3], 32
    $region17: #{tpu_custom_call.1} parent=1 // pred_fallthru
      _
    %v30 = vld [vmem:[#allocation2] sm:$0x3]
    %v31 = vld [vmem:[%s2] sm:$0x3]
    %v32 = vld [vmem:[%s1] sm:$0x3]
    %vm33 = vcmask 1047616
    %34 = vrot.lane.b32.xlu0 %v32, 8
    %v35 = vpop.permute.xlu0 %34
    %v36 = vsel %vm33, %v35, %v32
    %37 = vrot.lane.b32.xlu0 %v36, 8
    %v38 = vpop.permute.xlu0 %37
    %v39 = vsel %vm33, %v38, %v32
    %v40 = vlaneseq
    %v41 = vand.u32 %v40, 127
    %vm42 = vcmp.lt.s32.totalorder %v41, 0
    %v43 = vsub.s32 0, %v41
    %v44 = vsel %vm42, %v43, %v41
    %v45 = vshrl.u32 %v44, 3
    %v46 = vand.u32 %v44, 7
    %v47 = vsub.s32 0, %v46
    %v48 = vsel %vm42, %v47, %v46
    %vm49 = vcmp.ne.s32.totalorder %v48, 0
    %vm50 = vcmp.lt.s32.totalorder %v48, 0
    %vm51 = vmand %vm50, %vm49
    %v52 = vadd.s32 %v48, 8
    %v53 = vsel %vm51, %v52, %v48
    %vm54 = vcmp.eq.s32.totalorder %v53, 0
    %v55 = vsel %vm54, 1, 0
    %56 = vrot.lane.b32.xlu0 %v55, 7
    %v57 = vpop.permute.xlu0 %56
    %vm58 = vcmp.gt.s32.totalorder %v39, %v57
    %v59 = vsel %vm58, %v39, %v57
    %v60 = vmul.f32 %v30, %v31
    %vm61 = vcmp.gt.s32.totalorder %v59, 0
    %63 = vrot.lane.b32.xlu0 %v60, 7
    %v64 = vpop.permute.xlu0 %63
    %v66 = vsel %vm61, %v64, 0.0
    %68 = vrot.lane.b32.xlu0 %v66, 121
    %v69 = vpop.permute.xlu0 %68
    %vm71 = vcmask 58368
    %v72 = vsel %vm71, %v69, 0.0
    %73 = vadd.xlane.f32.xlu0 %v72
    %v74 = vpop.xlane.xlu0 %73
    %v75 = vrot.slane %v74, 4
    %v76 = vadd.f32 %v74, %v75
    %v77 = vrot.slane %v76, 2
    %v78 = vadd.f32 %v76, %v77
    %v79 = vrot.slane %v78, 1
    %v80 = vadd.f32 %v78, %v79
    %s81 = vtos %v80
    %v82 = vsel %vm61, 1.0, 0.0
    %84 = vrot.lane.b32.xlu0 %v82, 121
    %v85 = vpop.permute.xlu0 %84
    %v87 = vsel %vm71, %v85, 0.0
    %88 = vadd.xlane.f32.xlu0 %v87
    %v89 = vpop.xlane.xlu0 %88
    %v90 = vrot.slane %v89, 4
    %v91 = vadd.f32 %v89, %v90
    %v92 = vrot.slane %v91, 2
    %v93 = vadd.f32 %v91, %v92
    %v94 = vrot.slane %v93, 1
    %v95 = vadd.f32 %v93, %v94
    %s96 = vtos %v95
    %v97 = vstv %s81
    %vm98 = vcmask 0
    %99 = vst.msk [vmem:[#allocation5] sm:$0x1] %vm98, %v97
    %v100 = vstv %s96
    %101 = vst.msk [vmem:[#allocation6] sm:$0x1] %vm98, %v100
    // Predicated region
    $region18: #{tpu_custom_call.1} parent=1 // pred_check
      _
    $region19: #{tpu_custom_call.1} parent=1 // pred_check_branch
      %103 = sbr.rel (0) target = $region21
    $region20: #{tpu_custom_call.1} parent=1 // pred_region
      %s105 = ssub.s32 16, 16
      %106 = vsyncadd [#allocation4], %s105
      %s108 = sshll.u32 [#allocation5], 4
      %s109 = int_to_ptr.vmem [resolvable:$true] %s108
      %111 = dma.vmem_to_hbm [thread:$0]  %s109, 16, %s3, [#allocation4]
    $region21: #{tpu_custom_call.1} parent=1 // pred_fallthru
      _
    // Predicated region
    $region22: #{tpu_custom_call.1} parent=1 // pred_check
      _
    $region23: #{tpu_custom_call.1} parent=1 // pred_check_branch
      %113 = sbr.rel (0) target = $region25
    $region24: #{tpu_custom_call.1} parent=1 // pred_region
      %s115 = ssub.s32 16, 16
      %116 = vsyncadd [#allocation7], %s115
      %s118 = sshll.u32 [#allocation6], 4
      %s119 = int_to_ptr.vmem [resolvable:$true] %s118
      %121 = dma.vmem_to_hbm [thread:$0]  %s119, 16, %s4, [#allocation7]
    $region25: #{tpu_custom_call.1} parent=1 // pred_fallthru
      _
    // Predicated region
    $region26: #{tpu_custom_call.1} parent=1 // pred_check
      _
    $region27: #{tpu_custom_call.1} parent=1 // pred_check_branch
      %123 = sbr.rel (0) target = $region29
    $region28: #{tpu_custom_call.1} parent=1 // pred_region
      %124 = dma.done [#allocation4], 16
    $region29: #{tpu_custom_call.1} parent=1 // pred_fallthru
      _
    // Predicated region
    $region30: #{tpu_custom_call.1} parent=1 // pred_check
      _
    $region31: #{tpu_custom_call.1} parent=1 // pred_check_branch
      %126 = sbr.rel (0) target = $region33
    $region32: #{tpu_custom_call.1} parent=1 // pred_region
      %127 = dma.done [#allocation7], 16
    $region33: #{tpu_custom_call.1} parent=1 // pred_fallthru
      _
    %128 = vsyncpa [#allocation3], 1
    %129 = vsyncpa [#allocation4], 1
    %130 = vsyncpa [#allocation7], 1

</llo_original>
